<compile_context>
chip_gen: v7x
topology: tpu7x:2x2x1
jax: 0.10.0
libtpu: 0.0.40
codegen_flags: <defaults>
</compile_context>

<pallas_src>
import functools
import math

import jax
import jax.numpy as jnp
from jax import lax
from jax.experimental import pallas as pl
from jax.experimental.pallas import tpu as pltpu


def _layernorm_kernel(*refs, eps: float, inv_d: float, has_bias: bool,
                      packed: bool):
    """Normalize each (segment of a) row of the x tile.

    Unpacked: tile is (tm, d); statistics are plain cross-lane reductions.
    Packed:   tile is (tm, k*d); k original rows share one lane-dense packed
              row and per-row statistics are segmented sums computed on the
              MXU via a block-diagonal 0/1 matrix (the sums come back already
              broadcast across each segment's d lanes).
    """
    if packed:
        if has_bias:
            x_ref, w_ref, b_ref, seg_ref, o_ref = refs
        else:
            x_ref, w_ref, seg_ref, o_ref = refs
            b_ref = None
    else:
        seg_ref = None
        if has_bias:
            x_ref, w_ref, b_ref, o_ref = refs
        else:
            x_ref, w_ref, o_ref = refs
            b_ref = None

    f32 = jnp.float32
    x = x_ref[...]
    is_32bit = jnp.dtype(x.dtype).itemsize >= 4
    # 32-bit inputs: compute in f32.  16-bit inputs: keep the tile in its
    # native dtype (bf16 VPU is native on v6e/v7x) -- no full-tile f32 copy;
    # only the per-row statistics live in f32.
    work = x.astype(f32) if is_32bit else x

    if packed:
        seg = seg_ref[...]                       # (kd, kd) block-diagonal 0/1
        if is_32bit:
            def row_sum(z):
                # bf16 hi/lo split keeps ~f32 accuracy through the MXU
                # (bf16 multiplies, exact f32 accumulation).
                z = z.astype(f32)
                z_hi = z.astype(jnp.bfloat16)
                z_lo = (z - z_hi.astype(f32)).astype(jnp.bfloat16)
                return (jnp.dot(z_hi, seg, preferred_element_type=f32) +
                        jnp.dot(z_lo, seg, preferred_element_type=f32))
        else:
            def row_sum(z):
                return jnp.dot(z.astype(jnp.bfloat16), seg,
                               preferred_element_type=f32)
    else:
        def row_sum(z):
            return jnp.sum(z.astype(f32), axis=-1, keepdims=True)

    # Two-pass (centered) statistics: matches F.layer_norm numerics and avoids
    # the E[x^2] - mean^2 cancellation issue.  The tile is already in VMEM, so
    # the second pass costs VPU/MXU time only -- the kernel stays HBM-bound.
    mean = row_sum(work) * inv_d                 # f32, per row / per segment
    xc = work - mean.astype(work.dtype)          # centered, work dtype
    var = row_sum(xc * xc) * inv_d               # f32
    inv = lax.rsqrt(var + eps)                   # f32 (EUP)

    w = w_ref[...]
    if is_32bit:
        y = xc * inv * w.astype(f32)
        if has_bias:
            y = y + b_ref[...].astype(f32)
    else:
        y = xc * (inv.astype(work.dtype) * w.astype(work.dtype))
        if has_bias:
            y = y + b_ref[...].astype(work.dtype)
    o_ref[...] = y.astype(o_ref.dtype)


def _vmem_capacity_bytes() -> int:
    """Physical VMEM of the local TPU; conservative v7x-sized fallback."""
    try:
        return int(pltpu.get_tpu_info().vmem_capacity_bytes)
    except Exception:
        return 64 * 1024 * 1024


def _sublane_pack(itemsize: int) -> int:
    # 8 rows for 32-bit, 16 for 16-bit, 32 for 8-bit dtypes.
    return max(8, 32 // max(1, itemsize))


def _choose_row_tile(rows: int, width: int, itemsize: int, *, vmem_cap: int,
                     two_tc: bool) -> int:
    """Byte-budgeted row tile, rounded to the sublane packing multiple."""
    pack = _sublane_pack(itemsize)
    # Budget the x tile in *actual* bytes (16-bit inputs get ~2x taller tiles):
    # ~10 MiB on 128 MiB-VMEM chips (v5e/v6e), v7x-safe 4 MiB otherwise.
    target_tile_bytes = (10 << 20) if vmem_cap >= (100 << 20) else (4 << 20)
    tm = target_tile_bytes // max(1, width * itemsize)
    tm = min(tm, 4096)
    # Keep a multi-step grid only where it pays: ~8 steps so v7x's 2 TensorCores
    # can split the "parallel" row axis; ~4 steps on 1-TC chips (pipelining).
    min_steps = 8 if two_tc else 4
    if rows >= min_steps * pack:
        tm = min(tm, rows // min_steps)
    tm = max(pack, (tm // pack) * pack)
    # Never taller than the (sublane-rounded) row count.
    tm = min(tm, ((rows + pack - 1) // pack) * pack)
    return tm


def layer_norm(x, weight, bias=None, *, eps: float = 1e-5, block_rows=None):
    """LayerNorm over the last dim of `x`, matching torch.nn.functional.layer_norm."""
    orig_shape = x.shape
    d = int(orig_shape[-1])
    rows = int(math.prod(orig_shape[:-1]))
    has_bias = bias is not None
    itemsize = jnp.dtype(x.dtype).itemsize
    pack = _sublane_pack(itemsize)

    # ---- Lane-dense repack ---------------------------------------------------
    # If d is not a multiple of 128, fold k consecutive rows into one packed row
    # of width kd = lcm(d, 128): loads/stores become full-lane (no vst.msk) and
    # VMEM tiles waste no lanes.  Fall back to the plain (masked) path when
    # rows % k != 0 or kd would be too wide (seg-matrix / MXU cost).
    k = 1
    if d > 0 and d % 128 != 0:
        kd_full = math.lcm(d, 128)
        k_full = kd_full // d
        if k_full > 1 and kd_full <= 256 and rows % k_full == 0:
            k = k_full
    packed = k > 1
    kd = k * d
    rows_p = rows // k

    x2 = x.reshape(rows_p, kd)
    if packed:
        w2 = jnp.tile(weight.reshape(1, d), (1, k))            # (1, kd)
        b2 = jnp.tile(bias.reshape(1, d), (1, k)) if has_bias else None
        seg_id = jnp.arange(kd, dtype=jnp.int32) // d
        seg = (seg_id[:, None] == seg_id[None, :]).astype(jnp.bfloat16)
    else:
        w2 = weight.reshape(1, d)
        b2 = bias.reshape(1, d) if has_bias else None
        seg = None

    # ---- Generation-aware tiling / VMEM budget --------------------------------
    vmem_cap = _vmem_capacity_bytes()
    two_tc = vmem_cap < (100 << 20)          # v7x-style chip: 64 MiB VMEM, 2 TCs
    vmem_budget = min(vmem_cap - (16 << 20), 96 << 20)

    if block_rows is None:
        tm = _choose_row_tile(rows_p, kd, itemsize, vmem_cap=vmem_cap,
                              two_tc=two_tc)
    else:
        tm = max(pack, (int(block_rows) // pack) * pack)
        tm = min(tm, ((rows_p + pack - 1) // pack) * pack)

    def vmem_estimate(tm_):
        io = 4 * tm_ * kd * itemsize                           # 2x in + 2x out buffers
        scratch = (4 if itemsize >= 4 else 2) * tm_ * kd * 4   # f32 temporaries
        params = 3 * kd * 4 + (kd * kd * 2 if packed else 0)   # w, b, seg matrix
        return io + scratch + params + (4 << 20)

    while vmem_estimate(tm) > vmem_budget and tm > pack:
        tm = max(pack, ((tm // 2) // pack) * pack)
    vmem_limit = int(min(max(vmem_estimate(tm), 16 << 20), vmem_budget))

    grid = pl.cdiv(rows_p, tm)

    in_specs = [pl.BlockSpec((tm, kd), lambda i: (i, 0)),      # x row tile
                pl.BlockSpec((1, kd), lambda i: (0, 0))]       # weight (resident)
    operands = [x2, w2]
    if has_bias:
        in_specs.append(pl.BlockSpec((1, kd), lambda i: (0, 0)))   # bias (resident)
        operands.append(b2)
    if packed:
        in_specs.append(pl.BlockSpec((kd, kd), lambda i: (0, 0)))  # seg matrix
        operands.append(seg)

    kernel = functools.partial(_layernorm_kernel, eps=float(eps),
                               inv_d=1.0 / float(d), has_bias=has_bias,
                               packed=packed)

    out = pl.pallas_call(
        kernel,
        out_shape=jax.ShapeDtypeStruct((rows_p, kd), x.dtype),
        grid_spec=pltpu.PrefetchScalarGridSpec(
            num_scalar_prefetch=0,
            grid=(grid,),
            in_specs=in_specs,
            out_specs=pl.BlockSpec((tm, kd), lambda i: (i, 0)),
        ),
        compiler_params=pltpu.CompilerParams(
            dimension_semantics=("parallel",),
            vmem_limit_bytes=vmem_limit,
        ),
    )(*operands)

    return out.reshape(orig_shape)


if __name__ == "__main__":
    key = jax.random.PRNGKey(0)
    batch, seq, hidden = 2, 8, 32

    x = jax.random.normal(key, (batch, seq, hidden), dtype=jnp.float32)

    # Deterministic parameter init matching nn.Parameter(torch.ones(ndim)) /
    # torch.zeros(ndim); bias=True case.
    weight = jnp.ones((hidden,), dtype=jnp.float32)
    bias = jnp.zeros((hidden,), dtype=jnp.float32)

    def ref_ln(xx, w, b, eps=1e-5):
        xx = xx.astype(jnp.float32)
        mean = jnp.mean(xx, axis=-1, keepdims=True)
        var = jnp.mean((xx - mean) ** 2, axis=-1, keepdims=True)
        y = (xx - mean) * jax.lax.rsqrt(var + eps) * w
        return y + b if b is not None else y

    # Packed (lane-dense) path: d=32 < 128, rows divisible by k=4.
    y = layer_norm(x, weight, bias)
    jax.block_until_ready(y)
    assert jnp.allclose(y, ref_ln(x, weight, bias), atol=1e-4, rtol=1e-4)

    # bias=None path (bias operand omitted entirely from the pallas_call).
    y_nb = layer_norm(x, weight, None)
    jax.block_until_ready(y_nb)
    assert jnp.allclose(y_nb, ref_ln(x, weight, None), atol=1e-4, rtol=1e-4)

    # Unaligned row count (rows % k != 0) -> unpacked fallback with a partial
    # tail block (no jnp.pad / out[:rows] round-trips in the wrapper).
    x_odd = jax.random.normal(jax.random.PRNGKey(1), (3, 5, hidden),
                              dtype=jnp.float32)
    y_odd = layer_norm(x_odd, weight, bias, block_rows=8)
    jax.block_until_ready(y_odd)
    assert jnp.allclose(y_odd, ref_ln(x_odd, weight, bias), atol=1e-4, rtol=1e-4)

    # 16-bit input exercises the mixed-precision (no full-tile f32 copy) path.
    x_bf = x.astype(jnp.bfloat16)
    y_bf = layer_norm(x_bf, weight, bias)
    jax.block_until_ready(y_bf)
    assert jnp.allclose(y_bf.astype(jnp.float32), ref_ln(x_bf, weight, bias),
                        atol=0.15, rtol=0.05)

    print("KERNEL_OK")
</pallas_src>

<mosaic_0001>
module attributes {stable_mosaic.version = 11 : i64} {
  func.func @_layernorm_kernel(%arg0: i32, %arg1: memref<8x128xf32, #tpu.memory_space<vmem>>, %arg2: memref<1x128xf32, #tpu.memory_space<vmem>>, %arg3: memref<1x128xf32, #tpu.memory_space<vmem>>, %arg4: memref<128x128xbf16, #tpu.memory_space<vmem>>, %arg5: memref<8x128xf32, #tpu.memory_space<vmem>>) attributes {dimension_semantics = [#tpu.dimension_semantics<parallel>], iteration_bounds = array<i64: 1>, scalar_prefetch = 0 : i64, scratch_operands = 0 : i64, tpu.core_type = #tpu.core_type<tc>, window_params = [{transform_indices = @transform_0, window_bounds = array<i64: 8, 128>}, {pipeline_mode = #tpu.pipeline_mode<synchronous>, transform_indices = @transform_1, window_bounds = array<i64: 1, 128>}, {pipeline_mode = #tpu.pipeline_mode<synchronous>, transform_indices = @transform_2, window_bounds = array<i64: 1, 128>}, {pipeline_mode = #tpu.pipeline_mode<synchronous>, transform_indices = @transform_3, window_bounds = array<i64: 128, 128>}, {transform_indices = @transform_4, window_bounds = array<i64: 8, 128>}]} {
    %c0 = arith.constant 0 : index
    %c0_0 = arith.constant 0 : index
    %0 = vector.load %arg1[%c0, %c0_0] : memref<8x128xf32, #tpu.memory_space<vmem>>, vector<8x128xf32>
    %c0_1 = arith.constant 0 : index
    %c0_2 = arith.constant 0 : index
    %1 = vector.load %arg4[%c0_1, %c0_2] : memref<128x128xbf16, #tpu.memory_space<vmem>>, vector<128x128xbf16>
    %2 = arith.truncf %0 : vector<8x128xf32> to vector<8x128xbf16>
    %3 = arith.extf %2 : vector<8x128xbf16> to vector<8x128xf32>
    %4 = arith.subf %0, %3 : vector<8x128xf32>
    %5 = arith.truncf %4 : vector<8x128xf32> to vector<8x128xbf16>
    %cst = arith.constant dense<0.000000e+00> : vector<8x128xf32>
    %6 = tpu.matmul %2, %1, %cst {dimension_numbers = #tpu.dot_dimension_numbers<[1], [0], [0], [1], [0, 0, 1, 1], [], []>} : vector<8x128xbf16>, vector<128x128xbf16>, vector<8x128xf32> -> vector<8x128xf32>
    %cst_3 = arith.constant dense<0.000000e+00> : vector<8x128xf32>
    %7 = tpu.matmul %5, %1, %cst_3 {dimension_numbers = #tpu.dot_dimension_numbers<[1], [0], [0], [1], [0, 0, 1, 1], [], []>} : vector<8x128xbf16>, vector<128x128xbf16>, vector<8x128xf32> -> vector<8x128xf32>
    %8 = arith.addf %6, %7 : vector<8x128xf32>
    %cst_4 = arith.constant 3.125000e-02 : f32
    %9 = vector.broadcast %cst_4 : f32 to vector<8x128xf32>
    %10 = arith.mulf %8, %9 : vector<8x128xf32>
    %11 = arith.subf %0, %10 : vector<8x128xf32>
    %12 = arith.mulf %11, %11 : vector<8x128xf32>
    %13 = arith.truncf %12 : vector<8x128xf32> to vector<8x128xbf16>
    %14 = arith.extf %13 : vector<8x128xbf16> to vector<8x128xf32>
    %15 = arith.subf %12, %14 : vector<8x128xf32>
    %16 = arith.truncf %15 : vector<8x128xf32> to vector<8x128xbf16>
    %cst_5 = arith.constant dense<0.000000e+00> : vector<8x128xf32>
    %17 = tpu.matmul %13, %1, %cst_5 {dimension_numbers = #tpu.dot_dimension_numbers<[1], [0], [0], [1], [0, 0, 1, 1], [], []>} : vector<8x128xbf16>, vector<128x128xbf16>, vector<8x128xf32> -> vector<8x128xf32>
    %cst_6 = arith.constant dense<0.000000e+00> : vector<8x128xf32>
    %18 = tpu.matmul %16, %1, %cst_6 {dimension_numbers = #tpu.dot_dimension_numbers<[1], [0], [0], [1], [0, 0, 1, 1], [], []>} : vector<8x128xbf16>, vector<128x128xbf16>, vector<8x128xf32> -> vector<8x128xf32>
    %19 = arith.addf %17, %18 : vector<8x128xf32>
    %cst_7 = arith.constant 3.125000e-02 : f32
    %20 = vector.broadcast %cst_7 : f32 to vector<8x128xf32>
    %21 = arith.mulf %19, %20 : vector<8x128xf32>
    %cst_8 = arith.constant 9.99999974E-6 : f32
    %22 = vector.broadcast %cst_8 : f32 to vector<8x128xf32>
    %23 = arith.addf %21, %22 : vector<8x128xf32>
    %24 = math.rsqrt %23 : vector<8x128xf32>
    %c0_9 = arith.constant 0 : index
    %c0_10 = arith.constant 0 : index
    %25 = vector.load %arg2[%c0_9, %c0_10] : memref<1x128xf32, #tpu.memory_space<vmem>>, vector<1x128xf32>
    %26 = arith.mulf %11, %24 : vector<8x128xf32>
    %27 = vector.broadcast %25 : vector<1x128xf32> to vector<8x128xf32>
    %28 = arith.mulf %26, %27 : vector<8x128xf32>
    %c0_11 = arith.constant 0 : index
    %c0_12 = arith.constant 0 : index
    %29 = vector.load %arg3[%c0_11, %c0_12] : memref<1x128xf32, #tpu.memory_space<vmem>>, vector<1x128xf32>
    %30 = vector.broadcast %29 : vector<1x128xf32> to vector<8x128xf32>
    %31 = arith.addf %28, %30 : vector<8x128xf32>
    %c0_13 = arith.constant 0 : index
    %c0_14 = arith.constant 0 : index
    %32 = vector.load %arg5[%c0_13, %c0_14] : memref<8x128xf32, #tpu.memory_space<vmem>>, vector<8x128xf32>
    tpu.vector_store %arg5[%c0_13, %c0_14], %31 {strides = array<i32>} : memref<8x128xf32, #tpu.memory_space<vmem>>, vector<8x128xf32>,
    return
  }
  func.func @transform_0(%arg0: i32) -> (i32, i32) {
    %c0_i32 = arith.constant 0 : i32
    %c0_i32_0 = arith.constant 0 : i32
    return %arg0, %c0_i32 : i32, i32
  }
  func.func @transform_1(%arg0: i32) -> (i32, i32) {
    %c0_i32 = arith.constant 0 : i32
    %c0_i32_0 = arith.constant 0 : i32
    %c0_i32_1 = arith.constant 0 : i32
    return %c0_i32, %c0_i32_0 : i32, i32
  }
  func.func @transform_2(%arg0: i32) -> (i32, i32) {
    %c0_i32 = arith.constant 0 : i32
    %c0_i32_0 = arith.constant 0 : i32
    %c0_i32_1 = arith.constant 0 : i32
    return %c0_i32, %c0_i32_0 : i32, i32
  }
  func.func @transform_3(%arg0: i32) -> (i32, i32) {
    %c0_i32 = arith.constant 0 : i32
    %c0_i32_0 = arith.constant 0 : i32
    %c0_i32_1 = arith.constant 0 : i32
    return %c0_i32, %c0_i32_0 : i32, i32
  }
  func.func @transform_4(%arg0: i32) -> (i32, i32) {
    %c0_i32 = arith.constant 0 : i32
    %c0_i32_0 = arith.constant 0 : i32
    return %arg0, %c0_i32 : i32, i32
  }
}

</mosaic_0001>

<llo_original>
// kernel: tpu_custom_call.1
$region0: #{tpu_custom_call.1}
  #allocation0 [shape = 'u32[]', space=smem, size = 0x4, offset = 0x4, fixed_abs, tag = 'smem constant byte address 0x4 - core index']
  #allocation1 [shape = 'u32[144,128]{1,0:T(1,128)}', space=vmem, size = 0x12000, scoped, tag = 'internal scratch']
  %s0 = inlined_call_operand.hbm [shape: f32[4,128], index: 0, kind: input, shape index: {}]
  %s1 = inlined_call_operand.vmem [shape: f32[1,128], index: 1, kind: input, shape index: {}]
  %s2 = inlined_call_operand.vmem [shape: f32[1,128], index: 2, kind: input, shape index: {}]
  %s3 = inlined_call_operand.hbm [shape: bf16[128,128], index: 3, kind: input, shape index: {}]
  %s4 = inlined_call_operand.hbm [shape: f32[4,128], index: 4, kind: output, shape index: {}]
  %s5 = sld [smem:[#allocation0]]
  $region34: #{tpu_custom_call.1} parent=0
    _
  %s7 = ssub.s32 1, %s5
  %s8 = scalar_select 0, %s7, %s5
  $region1: #{tpu_custom_call.1} parent=0
    #allocation2 [shape = 'u8[4096]{0}', space=vmem, size = 0x1000, scoped, tag = 'input window, operand 0, single buffered']
    #allocation3 [shape = 's32[1]{0}', space=sflag, size = 0x4, scoped, tag = 'scoped memory for tpu_custom_call.1']
    #allocation4 [shape = 's32[1]{0}', space=sflag, size = 0x4, scoped, tag = 'scoped memory for tpu_custom_call.1']
    #allocation5 [shape = 'u8[32768]{0}', space=vmem, size = 0x8000, scoped, tag = 'input window, operand 3, single buffered']
    #allocation6 [shape = 's32[1]{0}', space=sflag, size = 0x4, scoped, tag = 'scoped memory for tpu_custom_call.1']
    #allocation7 [shape = 'u8[4096]{0}', space=vmem, size = 0x1000, scoped, tag = 'output window, operand 0, single buffered']
    %9 = vsyncpa [#allocation3], 0
    %10 = vsyncpa [#allocation6], 0
    %11 = vsyncpa [#allocation4], 0
    // Predicated region
    $region2: #{tpu_custom_call.1} parent=1 // pred_check
      _
    $region3: #{tpu_custom_call.1} parent=1 // pred_check_branch
      %13 = sbr.rel (0) target = $region5
    $region4: #{tpu_custom_call.1} parent=1 // pred_region
      %s15 = ssub.s32 128, 64
      %16 = vsyncadd [#allocation3], %s15
      %s17 = sshll.u32 [#allocation2], 4
      %s18 = int_to_ptr.vmem [resolvable:$true] %s17
      %23 = dma.hbm_to_vmem [thread:$0]  %s0, 64, %s18, [#allocation3], 64, 64, 4
    $region5: #{tpu_custom_call.1} parent=1 // pred_fallthru
      _
    // Predicated region
    $region6: #{tpu_custom_call.1} parent=1 // pred_check
      _
    $region7: #{tpu_custom_call.1} parent=1 // pred_check_branch
      %25 = sbr.rel (0) target = $region9
    $region8: #{tpu_custom_call.1} parent=1 // pred_region
      _
    $region9: #{tpu_custom_call.1} parent=1 // pred_fallthru
      _
    // Predicated region
    $region10: #{tpu_custom_call.1} parent=1 // pred_check
      _
    $region11: #{tpu_custom_call.1} parent=1 // pred_check_branch
      %27 = sbr.rel (0) target = $region13
    $region12: #{tpu_custom_call.1} parent=1 // pred_region
      _
    $region13: #{tpu_custom_call.1} parent=1 // pred_fallthru
      _
    // Predicated region
    $region14: #{tpu_custom_call.1} parent=1 // pred_check
      _
    $region15: #{tpu_custom_call.1} parent=1 // pred_check_branch
      %29 = sbr.rel (0) target = $region17
    $region16: #{tpu_custom_call.1} parent=1 // pred_region
      %s31 = ssub.s32 1024, 1024
      %32 = vsyncadd [#allocation6], %s31
      %s33 = sshll.u32 [#allocation5], 4
      %s34 = int_to_ptr.vmem [resolvable:$true] %s33
      %39 = dma.hbm_to_vmem [thread:$0]  %s3, 1024, %s34, [#allocation6], 64, 64, 4
    $region17: #{tpu_custom_call.1} parent=1 // pred_fallthru
      _
    // Predicated region
    $region18: #{tpu_custom_call.1} parent=1 // pred_check
      _
    $region19: #{tpu_custom_call.1} parent=1 // pred_check_branch
      %41 = sbr.rel (0) target = $region21
    $region20: #{tpu_custom_call.1} parent=1 // pred_region
      %42 = dma.done [#allocation3], 128
    $region21: #{tpu_custom_call.1} parent=1 // pred_fallthru
      _
    // Predicated region
    $region22: #{tpu_custom_call.1} parent=1 // pred_check
      _
    $region23: #{tpu_custom_call.1} parent=1 // pred_check_branch
      %44 = sbr.rel (0) target = $region25
    $region24: #{tpu_custom_call.1} parent=1 // pred_region
      %45 = dma.done [#allocation6], 1024
    $region25: #{tpu_custom_call.1} parent=1 // pred_fallthru
      _
    %v47 = vld [vmem:[#allocation2] sm:$0xff]
    %v48 = vld [vmem:[#allocation5] sm:$0xf]
    %v49 = vld [vmem:[#allocation5 + $0x4] sm:$0xf]
    %v50 = vld [vmem:[#allocation5 + $0x8] sm:$0xf]
    %v51 = vld [vmem:[#allocation5 + $0xc] sm:$0xf]
    %v52 = vld [vmem:[#allocation5 + $0x10] sm:$0xf]
    %v53 = vld [vmem:[#allocation5 + $0x14] sm:$0xf]
    %v54 = vld [vmem:[#allocation5 + $0x18] sm:$0xf]
    %v55 = vld [vmem:[#allocation5 + $0x1c] sm:$0xf]
    %v56 = vld [vmem:[#allocation5 + $0x20] sm:$0xf]
    %v57 = vld [vmem:[#allocation5 + $0x24] sm:$0xf]
    %v58 = vld [vmem:[#allocation5 + $0x28] sm:$0xf]
    %v59 = vld [vmem:[#allocation5 + $0x2c] sm:$0xf]
    %v60 = vld [vmem:[#allocation5 + $0x30] sm:$0xf]
    %v61 = vld [vmem:[#allocation5 + $0x34] sm:$0xf]
    %v62 = vld [vmem:[#allocation5 + $0x38] sm:$0xf]
    %v63 = vld [vmem:[#allocation5 + $0x3c] sm:$0xf]
    %v64 = vpack.c.bf16 %v47, %v47
    %v65 = vunpack.c.l.bf16 %v64
    %v66 = vsub.f32 %v47, %v65
    %v67 = vpack.c.bf16 %v66, %v66
    %v84 = vunpack.c.l.b16 %v48
    %v85 = vunpack.c.l.b16 %v49
    %v86 = vunpack.c.l.b16 %v50
    %v87 = vunpack.c.l.b16 %v51
    %v88 = vunpack.c.l.b16 %v52
    %v89 = vunpack.c.l.b16 %v53
    %v90 = vunpack.c.l.b16 %v54
    %v91 = vunpack.c.l.b16 %v55
    %v92 = vunpack.c.l.b16 %v56
    %v93 = vunpack.c.l.b16 %v57
    %v94 = vunpack.c.l.b16 %v58
    %v95 = vunpack.c.l.b16 %v59
    %v96 = vunpack.c.l.b16 %v60
    %v97 = vunpack.c.l.b16 %v61
    %v98 = vunpack.c.l.b16 %v62
    %v99 = vunpack.c.l.b16 %v63
    %v100 = vpack.c.b16 %v85, %v84
    %v101 = vpack.c.b16 %v87, %v86
    %v102 = vpack.c.b16 %v89, %v88
    %v103 = vpack.c.b16 %v91, %v90
    %v104 = vpack.c.b16 %v93, %v92
    %v105 = vpack.c.b16 %v95, %v94
    %v106 = vpack.c.b16 %v97, %v96
    %v107 = vpack.c.b16 %v99, %v98
    %116 = vmatprep.subr.bf16.mxu0 0
    %117 = vmatpush1.bf16.msra.mxu0 %v100
    %118 = vmatprep.subr.bf16.mxu0 0
    %119 = vmatpush1.bf16.msra.mxu0 %v101
    %120 = vmatprep.subr.bf16.mxu0 0
    %121 = vmatpush1.bf16.msra.mxu0 %v102
    %122 = vmatprep.subr.bf16.mxu0 0
    %123 = vmatpush1.bf16.msra.mxu0 %v103
    %124 = vmatprep.subr.bf16.mxu0 0
    %125 = vmatpush1.bf16.msra.mxu0 %v104
    %126 = vmatprep.subr.bf16.mxu0 0
    %127 = vmatpush1.bf16.msra.mxu0 %v105
    %128 = vmatprep.subr.bf16.mxu0 0
    %129 = vmatpush1.bf16.msra.mxu0 %v106
    %130 = vmatprep.subr.bf16.mxu0 0
    %131 = vmatpush1.bf16.msra.mxu0 %v107
    %132 = vmatprep.subr.bf16.mxu0 0
    %133 = vmatpush1.bf16.msra.mxu0 0
    %134 = vmatprep.subr.bf16.mxu0 0
    %135 = vmatpush1.bf16.msra.mxu0 0
    %136 = vmatprep.subr.bf16.mxu0 0
    %137 = vmatpush1.bf16.msra.mxu0 0
    %138 = vmatprep.subr.bf16.mxu0 0
    %139 = vmatpush1.bf16.msra.mxu0 0
    %140 = vmatprep.subr.bf16.mxu0 0
    %141 = vmatpush1.bf16.msra.mxu0 0
    %142 = vmatprep.subr.bf16.mxu0 0
    %143 = vmatpush1.bf16.msra.mxu0 0
    %144 = vmatprep.subr.bf16.mxu0 0
    %145 = vmatpush1.bf16.msra.mxu0 0
    %146 = vmatprep.subr.bf16.mxu0 0
    %147 = vmatpush1.bf16.msra.mxu0 0
    %148 = vmatprep.mubr.bf16.mxu0 0
    %149 = vmatmul.mubr.bf16.gmra.mrb[0].mxu0 %v67
    %v150 = vpop.f32.mrb[0].mxu0
    %v151 = vadd.f32 0.0, %v150
    %v152 = vpop.f32.mrb[0].mxu0
    %v153 = vpop.f32.mrb[0].mxu0
    %v154 = vpop.f32.mrb[0].mxu0
    %155 = vdwg.mxu0
    %156 = vmatprep.subr.bf16.mxu0 0
    %157 = vmatpush1.bf16.msra.mxu0 %v100
    %158 = vmatprep.subr.bf16.mxu0 0
    %159 = vmatpush1.bf16.msra.mxu0 %v101
    %160 = vmatprep.subr.bf16.mxu0 0
    %161 = vmatpush1.bf16.msra.mxu0 %v102
    %162 = vmatprep.subr.bf16.mxu0 0
    %163 = vmatpush1.bf16.msra.mxu0 %v103
    %164 = vmatprep.subr.bf16.mxu0 0
    %165 = vmatpush1.bf16.msra.mxu0 %v104
    %166 = vmatprep.subr.bf16.mxu0 0
    %167 = vmatpush1.bf16.msra.mxu0 %v105
    %168 = vmatprep.subr.bf16.mxu0 0
    %169 = vmatpush1.bf16.msra.mxu0 %v106
    %170 = vmatprep.subr.bf16.mxu0 0
    %171 = vmatpush1.bf16.msra.mxu0 %v107
    %172 = vmatprep.subr.bf16.mxu0 0
    %173 = vmatpush1.bf16.msra.mxu0 0
    %174 = vmatprep.subr.bf16.mxu0 0
    %175 = vmatpush1.bf16.msra.mxu0 0
    %176 = vmatprep.subr.bf16.mxu0 0
    %177 = vmatpush1.bf16.msra.mxu0 0
    %178 = vmatprep.subr.bf16.mxu0 0
    %179 = vmatpush1.bf16.msra.mxu0 0
    %180 = vmatprep.subr.bf16.mxu0 0
    %181 = vmatpush1.bf16.msra.mxu0 0
    %182 = vmatprep.subr.bf16.mxu0 0
    %183 = vmatpush1.bf16.msra.mxu0 0
    %184 = vmatprep.subr.bf16.mxu0 0
    %185 = vmatpush1.bf16.msra.mxu0 0
    %186 = vmatprep.subr.bf16.mxu0 0
    %187 = vmatpush1.bf16.msra.mxu0 0
    %188 = vmatprep.mubr.bf16.mxu0 0
    %189 = vmatmul.mubr.bf16.gmra.mrb[0].mxu0 %v64
    %v190 = vpop.f32.mrb[0].mxu0
    %v191 = vadd.f32 %v151, %v190
    %v192 = vpop.f32.mrb[0].mxu0
    %v193 = vpop.f32.mrb[0].mxu0
    %v194 = vpop.f32.mrb[0].mxu0
    %195 = vdwg.mxu0
    %v196 = vmul.f32 %v191, 0.03125
    %v197 = vsub.f32 %v47, %v196
    %v198 = vmul.f32 %v197, %v197
    %v199 = vpack.c.bf16 %v198, %v198
    %v200 = vunpack.c.l.bf16 %v199
    %v201 = vsub.f32 %v198, %v200
    %v202 = vpack.c.bf16 %v201, %v201
    %203 = vmatprep.subr.bf16.mxu0 0
    %204 = vmatpush1.bf16.msra.mxu0 %v100
    %205 = vmatprep.subr.bf16.mxu0 0
    %206 = vmatpush1.bf16.msra.mxu0 %v101
    %207 = vmatprep.subr.bf16.mxu0 0
    %208 = vmatpush1.bf16.msra.mxu0 %v102
    %209 = vmatprep.subr.bf16.mxu0 0
    %210 = vmatpush1.bf16.msra.mxu0 %v103
    %211 = vmatprep.subr.bf16.mxu0 0
    %212 = vmatpush1.bf16.msra.mxu0 %v104
    %213 = vmatprep.subr.bf16.mxu0 0
    %214 = vmatpush1.bf16.msra.mxu0 %v105
    %215 = vmatprep.subr.bf16.mxu0 0
    %216 = vmatpush1.bf16.msra.mxu0 %v106
    %217 = vmatprep.subr.bf16.mxu0 0
    %218 = vmatpush1.bf16.msra.mxu0 %v107
    %219 = vmatprep.subr.bf16.mxu0 0
    %220 = vmatpush1.bf16.msra.mxu0 0
    %221 = vmatprep.subr.bf16.mxu0 0
    %222 = vmatpush1.bf16.msra.mxu0 0
    %223 = vmatprep.subr.bf16.mxu0 0
    %224 = vmatpush1.bf16.msra.mxu0 0
    %225 = vmatprep.subr.bf16.mxu0 0
    %226 = vmatpush1.bf16.msra.mxu0 0
    %227 = vmatprep.subr.bf16.mxu0 0
    %228 = vmatpush1.bf16.msra.mxu0 0
    %229 = vmatprep.subr.bf16.mxu0 0
    %230 = vmatpush1.bf16.msra.mxu0 0
    %231 = vmatprep.subr.bf16.mxu0 0
    %232 = vmatpush1.bf16.msra.mxu0 0
    %233 = vmatprep.subr.bf16.mxu0 0
    %234 = vmatpush1.bf16.msra.mxu0 0
    %235 = vmatprep.mubr.bf16.mxu0 0
    %236 = vmatmul.mubr.bf16.gmra.mrb[0].mxu0 %v202
    %v237 = vpop.f32.mrb[0].mxu0
    %v238 = vadd.f32 0.0, %v237
    %v239 = vpop.f32.mrb[0].mxu0
    %v240 = vpop.f32.mrb[0].mxu0
    %v241 = vpop.f32.mrb[0].mxu0
    %242 = vdwg.mxu0
    %243 = vmatprep.subr.bf16.mxu0 0
    %244 = vmatpush1.bf16.msra.mxu0 %v100
    %245 = vmatprep.subr.bf16.mxu0 0
    %246 = vmatpush1.bf16.msra.mxu0 %v101
    %247 = vmatprep.subr.bf16.mxu0 0
    %248 = vmatpush1.bf16.msra.mxu0 %v102
    %249 = vmatprep.subr.bf16.mxu0 0
    %250 = vmatpush1.bf16.msra.mxu0 %v103
    %251 = vmatprep.subr.bf16.mxu0 0
    %252 = vmatpush1.bf16.msra.mxu0 %v104
    %253 = vmatprep.subr.bf16.mxu0 0
    %254 = vmatpush1.bf16.msra.mxu0 %v105
    %255 = vmatprep.subr.bf16.mxu0 0
    %256 = vmatpush1.bf16.msra.mxu0 %v106
    %257 = vmatprep.subr.bf16.mxu0 0
    %258 = vmatpush1.bf16.msra.mxu0 %v107
    %259 = vmatprep.subr.bf16.mxu0 0
    %260 = vmatpush1.bf16.msra.mxu0 0
    %261 = vmatprep.subr.bf16.mxu0 0
    %262 = vmatpush1.bf16.msra.mxu0 0
    %263 = vmatprep.subr.bf16.mxu0 0
    %264 = vmatpush1.bf16.msra.mxu0 0
    %265 = vmatprep.subr.bf16.mxu0 0
    %266 = vmatpush1.bf16.msra.mxu0 0
    %267 = vmatprep.subr.bf16.mxu0 0
    %268 = vmatpush1.bf16.msra.mxu0 0
    %269 = vmatprep.subr.bf16.mxu0 0
    %270 = vmatpush1.bf16.msra.mxu0 0
    %271 = vmatprep.subr.bf16.mxu0 0
    %272 = vmatpush1.bf16.msra.mxu0 0
    %273 = vmatprep.subr.bf16.mxu0 0
    %274 = vmatpush1.bf16.msra.mxu0 0
    %275 = vmatprep.mubr.bf16.mxu0 0
    %276 = vmatmul.mubr.bf16.gmra.mrb[0].mxu0 %v199
    %v277 = vpop.f32.mrb[0].mxu0
    %v278 = vadd.f32 %v238, %v277
    %v279 = vpop.f32.mrb[0].mxu0
    %v280 = vpop.f32.mrb[0].mxu0
    %v281 = vpop.f32.mrb[0].mxu0
    %282 = vdwg.mxu0
    %v283 = vmul.f32 %v278, 0.03125
    %v284 = vadd.f32 %v283, 1e-05
    %v285 = vrsqrt.pop %v284
    %v286 = vld [vmem:[%s1] sm:$0x1]
    %v287 = vmul.f32 %v197, %v285
    %v289 = vlaneseq
    %v290 = vshrl.u32 %v289, 7
    %v291 = vsub.s32 0, %v290
    %v292 = vrot.slane %v286, %v291
    %v294 = vmul.f32 %v287, %v292
    %v295 = vld [vmem:[%s2] sm:$0x1]
    %v297 = vlaneseq
    %v298 = vshrl.u32 %v297, 7
    %v299 = vsub.s32 0, %v298
    %v300 = vrot.slane %v295, %v299
    %v302 = vadd.f32 %v294, %v300
    %303 = vst [vmem:[#allocation7] sm:$0xff] %v302
    // Predicated region
    $region26: #{tpu_custom_call.1} parent=1 // pred_check
      _
    $region27: #{tpu_custom_call.1} parent=1 // pred_check_branch
      %305 = sbr.rel (0) target = $region29
    $region28: #{tpu_custom_call.1} parent=1 // pred_region
      %s307 = ssub.s32 128, 64
      %308 = vsyncadd [#allocation4], %s307
      %s309 = sshll.u32 [#allocation7], 4
      %s310 = int_to_ptr.vmem [resolvable:$true] %s309
      %315 = dma.vmem_to_hbm [thread:$0]  %s310, 64, %s4, [#allocation4], 64, 64, 4
    $region29: #{tpu_custom_call.1} parent=1 // pred_fallthru
      _
    // Predicated region
    $region30: #{tpu_custom_call.1} parent=1 // pred_check
      _
    $region31: #{tpu_custom_call.1} parent=1 // pred_check_branch
      %317 = sbr.rel (0) target = $region33
    $region32: #{tpu_custom_call.1} parent=1 // pred_region
      %318 = dma.done [#allocation4], 128
    $region33: #{tpu_custom_call.1} parent=1 // pred_fallthru
      _
    %319 = vsyncpa [#allocation3], 1
    %320 = vsyncpa [#allocation6], 1
    %321 = vsyncpa [#allocation4], 1

</llo_original>
